<compile_context>
chip_gen: v6e
topology: v6e:2x2x1
jax: 0.10.0
libtpu: 0.0.40
codegen_flags: <defaults>
</compile_context>

<pallas_src>
import functools

import jax
import jax.numpy as jnp
from jax.experimental import pallas as pl
from jax.experimental.pallas import tpu as pltpu


def _round_up(x, m):
    return ((x + m - 1) // m) * m


# ---------------------------------------------------------------------------
# Pass 1: full-batch statistics of h = x @ W1 (sum and sum of squares).
# Output block is the same (0, 0) block every step -> VMEM-resident accumulator;
# the grid axis must be "arbitrary".  Padded (zero) rows contribute zero.
# ---------------------------------------------------------------------------
def _stats_kernel(x_ref, w1_ref, stats_ref):
    h = jnp.dot(x_ref[...], w1_ref[...], preferred_element_type=jnp.float32)
    tile_stats = jnp.concatenate(
        [jnp.sum(h, axis=0, keepdims=True),
         jnp.sum(h * h, axis=0, keepdims=True)], axis=0)

    @pl.when(pl.program_id(0) == 0)
    def _():
        stats_ref[...] = jnp.zeros_like(stats_ref)

    stats_ref[...] += tile_stats


# ---------------------------------------------------------------------------
# Pass 2: fold BN into scale/shift in-kernel, recompute x@W1, normalize + ReLU,
# then the remaining MLP.  Batch tiles are independent -> parallel grid axis.
# Note: the Linear-1 bias b1 cancels exactly in the BatchNorm, so it never
# appears here:  BN(xW1 + b1) = (xW1) * scale + (beta - mean(xW1) * scale).
# ---------------------------------------------------------------------------
def _mlp_kernel(x_ref, w1_ref, stats_ref, gamma_ref, beta_ref,
                w2_ref, b2_ref, w3_ref, b3_ref, w4_ref, b4_ref, o_ref,
                *, batch):
    inv_b = 1.0 / batch
    mean = stats_ref[0:1, :] * inv_b                      # mean of x@W1 (no b1)
    var = stats_ref[1:2, :] * inv_b - mean * mean         # biased variance
    scale = gamma_ref[...] * jax.lax.rsqrt(var + 1e-5)    # EUP rsqrt, 60 elems
    shift = beta_ref[...] - mean * scale

    h = jnp.dot(x_ref[...], w1_ref[...], preferred_element_type=jnp.float32)
    h = jnp.maximum(h * scale + shift, 0.0)
    h = jnp.maximum(jnp.dot(h, w2_ref[...],
                            preferred_element_type=jnp.float32) + b2_ref[...], 0.0)
    h = jnp.maximum(jnp.dot(h, w3_ref[...],
                            preferred_element_type=jnp.float32) + b3_ref[...], 0.0)
    o_ref[...] = (jnp.dot(h, w4_ref[...],
                          preferred_element_type=jnp.float32) + b4_ref[...])


def neural_network_forward(x, params, *, tile_batch=2048, x_in_bf16=False):
    """x: (B, n_input_features) float32. Returns (B, 3) float32."""
    B, n_in = x.shape
    h1f = params["w1"].shape[1]          # 60
    h2f = params["w2"].shape[1]          # 30
    n_out = params["w4"].shape[1]        # 3

    # Detect v7x (2 TensorCores) so the pass-2 grid can be core-split.
    try:
        kind = jax.devices()[0].device_kind.lower()
    except Exception:  # pragma: no cover - defensive
        kind = ""
    is_v7 = ("v7" in kind) or ("tpu7" in kind)
    n_cores = 2 if is_v7 else 1

    # Batch tile: multiple of 8 (f32 sublane tile), capped at tile_batch, and on
    # multi-core chips small enough that every core gets at least one tile.
    tb = min(tile_batch, _round_up(pl.cdiv(B, n_cores), 8))
    b_pad = _round_up(B, tb)
    nt = b_pad // tb

    x_p = x if b_pad == B else jnp.pad(x, ((0, b_pad - B), (0, 0)))
    w1 = params["w1"]
    if x_in_bf16:
        # Optional: halves the (dominant) x read traffic; slight deviation from
        # strict f32 PyTorch numerics, so off by default.
        x_p = x_p.astype(jnp.bfloat16)
        w1 = w1.astype(jnp.bfloat16)

    def resident(shape):
        # Weight / bias / stats block stays in the same VMEM slot across steps.
        return pl.BlockSpec(shape, lambda i: (0, 0))

    vmem_bytes = 32 * 1024 * 1024

    # ------------------------- pass 1: BN statistics ------------------------
    stats = pl.pallas_call(
        _stats_kernel,
        out_shape=jax.ShapeDtypeStruct((2, h1f), jnp.float32),
        grid=(nt,),
        in_specs=[pl.BlockSpec((tb, n_in), lambda i: (i, 0)),
                  resident((n_in, h1f))],
        out_specs=resident((2, h1f)),
        compiler_params=pltpu.CompilerParams(
            dimension_semantics=("arbitrary",), vmem_limit_bytes=vmem_bytes),
        cost_estimate=pl.CostEstimate(
            flops=2 * b_pad * n_in * h1f + 3 * b_pad * h1f,
            transcendentals=0,
            bytes_accessed=x_p.dtype.itemsize * b_pad * n_in
                           + 4 * (n_in * h1f + 2 * h1f)),
    )(x_p, w1)

    # --------------------- pass 2: BN fold + rest of MLP --------------------
    pass2_sem = (pltpu.CORE_PARALLEL,) if is_v7 else ("parallel",)

    out = pl.pallas_call(
        functools.partial(_mlp_kernel, batch=B),
        out_shape=jax.ShapeDtypeStruct((b_pad, n_out), jnp.float32),
        grid=(nt,),
        in_specs=[pl.BlockSpec((tb, n_in), lambda i: (i, 0)),
                  resident((n_in, h1f)),
                  resident((2, h1f)),
                  resident((1, h1f)), resident((1, h1f)),
                  resident((h1f, h2f)), resident((1, h2f)),
                  resident((h2f, h2f)), resident((1, h2f)),
                  resident((h2f, n_out)), resident((1, n_out))],
        out_specs=pl.BlockSpec((tb, n_out), lambda i: (i, 0)),
        compiler_params=pltpu.CompilerParams(
            dimension_semantics=pass2_sem, vmem_limit_bytes=vmem_bytes),
        cost_estimate=pl.CostEstimate(
            flops=2 * b_pad * (n_in * h1f + h1f * h2f + h2f * h2f + h2f * n_out)
                  + 6 * b_pad * h1f,
            transcendentals=0,
            bytes_accessed=x_p.dtype.itemsize * b_pad * n_in
                           + 4 * (b_pad * n_out + n_in * h1f + 4 * h1f
                                  + h1f * h2f + h2f * h2f + 2 * h2f
                                  + h2f * n_out + n_out)),
    )(x_p, w1, stats, params["gamma"], params["beta"],
      params["w2"], params["b2"], params["w3"], params["b3"],
      params["w4"], params["b4"])

    return out[:B]


def _reference_forward(x, params):
    """Pure-JAX reference matching the PyTorch training-mode forward."""
    h = x @ params["w1"] + params["b1"]
    mean = jnp.mean(h, axis=0, keepdims=True)
    var = jnp.mean((h - mean) ** 2, axis=0, keepdims=True)  # biased
    h = (h - mean) * jax.lax.rsqrt(var + 1e-5)
    h = jnp.maximum(h * params["gamma"] + params["beta"], 0.0)
    h = jnp.maximum(h @ params["w2"] + params["b2"], 0.0)
    h = jnp.maximum(h @ params["w3"] + params["b3"], 0.0)
    return h @ params["w4"] + params["b4"]


def init_params(key, n_input_features, h_features=60, h_features2=30):
    """Deterministic synthetic parameters matching the PyTorch module shapes."""
    ks = jax.random.split(key, 8)

    def lin(kw, kb, fan_in, fan_out):
        bound = 1.0 / jnp.sqrt(fan_in)
        w = jax.random.uniform(kw, (fan_in, fan_out), jnp.float32, -bound, bound)
        b = jax.random.uniform(kb, (1, fan_out), jnp.float32, -bound, bound)
        return w, b

    w1, b1 = lin(ks[0], ks[1], n_input_features, h_features)
    w2, b2 = lin(ks[2], ks[3], h_features, h_features2)
    w3, b3 = lin(ks[4], ks[5], h_features2, h_features2)
    w4, b4 = lin(ks[6], ks[7], h_features2, 3)
    return {
        "w1": w1, "b1": b1,
        "gamma": jnp.ones((1, h_features), jnp.float32),   # BatchNorm weight
        "beta": jnp.zeros((1, h_features), jnp.float32),   # BatchNorm bias
        "w2": w2, "b2": b2,
        "w3": w3, "b3": b3,
        "w4": w4, "b4": b4,
    }


if __name__ == "__main__":
    key = jax.random.PRNGKey(0)
    k_x, k_p = jax.random.split(key)

    batch = 8
    n_input_features = 16
    x = jax.random.normal(k_x, (batch, n_input_features), jnp.float32)
    params = init_params(k_p, n_input_features)

    # TODO(synk): PyTorch training-mode BatchNorm also updates
    # running_mean/running_var as a side effect; only the forward value is
    # reproduced here.
    out = neural_network_forward(x, params)
    jax.block_until_ready(out)
    assert out.shape == (batch, 3), out.shape

    ref = _reference_forward(x, params)
    assert jnp.allclose(out, ref, rtol=1e-3, atol=1e-3), (
        float(jnp.max(jnp.abs(out - ref))))

    print("KERNEL_OK")
</pallas_src>

<mosaic_0001>
module attributes {stable_mosaic.version = 11 : i64} {
  func.func @_stats_kernel(%arg0: i32, %arg1: memref<8x16xf32, #tpu.memory_space<vmem>>, %arg2: memref<16x60xf32, #tpu.memory_space<vmem>>, %arg3: memref<2x60xf32, #tpu.memory_space<vmem>>) attributes {dimension_semantics = [#tpu.dimension_semantics<arbitrary>], iteration_bounds = array<i64: 1>, scalar_prefetch = 0 : i64, scratch_operands = 0 : i64, tpu.core_type = #tpu.core_type<tc>, window_params = [{transform_indices = @transform_0, window_bounds = array<i64: 8, 16>}, {pipeline_mode = #tpu.pipeline_mode<synchronous>, transform_indices = @transform_1, window_bounds = array<i64: 16, 60>}, {pipeline_mode = #tpu.pipeline_mode<synchronous>, transform_indices = @transform_2, window_bounds = array<i64: 2, 60>}]} {
    %c0 = arith.constant 0 : index
    %c0_0 = arith.constant 0 : index
    %0 = vector.load %arg1[%c0, %c0_0] : memref<8x16xf32, #tpu.memory_space<vmem>>, vector<8x16xf32>
    %c0_1 = arith.constant 0 : index
    %c0_2 = arith.constant 0 : index
    %1 = vector.load %arg2[%c0_1, %c0_2] : memref<16x60xf32, #tpu.memory_space<vmem>>, vector<16x60xf32>
    %cst = arith.constant dense<0.000000e+00> : vector<8x60xf32>
    %2 = tpu.matmul %0, %1, %cst {dimension_numbers = #tpu.dot_dimension_numbers<[1], [0], [0], [1], [0, 0, 1, 1], [], []>} : vector<8x16xf32>, vector<16x60xf32>, vector<8x60xf32> -> vector<8x60xf32>
    %cst_3 = arith.constant dense<0.000000e+00> : vector<60xf32>
    %3 = vector.multi_reduction <add>, %2, %cst_3 [0] : vector<8x60xf32> to vector<60xf32>
    %4 = vector.shape_cast %3 : vector<60xf32> to vector<1x60xf32>
    %5 = arith.mulf %2, %2 : vector<8x60xf32>
    %cst_4 = arith.constant dense<0.000000e+00> : vector<60xf32>
    %6 = vector.multi_reduction <add>, %5, %cst_4 [0] : vector<8x60xf32> to vector<60xf32>
    %7 = vector.shape_cast %6 : vector<60xf32> to vector<1x60xf32>
    %8 = tpu.concatenate %4, %7 in 0 : vector<1x60xf32>, vector<1x60xf32> -> vector<2x60xf32>
    %c0_i32 = arith.constant 0 : i32
    %9 = arith.cmpi eq, %arg0, %c0_i32 : i32
    %10 = arith.extui %9 : i1 to i32
    %c0_i32_5 = arith.constant 0 : i32
    %11 = arith.cmpi ne, %10, %c0_i32_5 : i32
    scf.if %11 {
      %cst_10 = arith.constant 0.000000e+00 : f32
      %15 = vector.broadcast %cst_10 : f32 to vector<2x60xf32>
      %c0_11 = arith.constant 0 : index
      %c0_12 = arith.constant 0 : index
      %16 = vector.load %arg3[%c0_11, %c0_12] : memref<2x60xf32, #tpu.memory_space<vmem>>, vector<2x60xf32>
      tpu.vector_store %arg3[%c0_11, %c0_12], %15 {strides = array<i32>} : memref<2x60xf32, #tpu.memory_space<vmem>>, vector<2x60xf32>,
    } else {
    }
    %c0_6 = arith.constant 0 : index
    %c0_7 = arith.constant 0 : index
    %12 = vector.load %arg3[%c0_6, %c0_7] : memref<2x60xf32, #tpu.memory_space<vmem>>, vector<2x60xf32>
    %13 = arith.addf %12, %8 : vector<2x60xf32>
    %c0_8 = arith.constant 0 : index
    %c0_9 = arith.constant 0 : index
    %14 = vector.load %arg3[%c0_8, %c0_9] : memref<2x60xf32, #tpu.memory_space<vmem>>, vector<2x60xf32>
    tpu.vector_store %arg3[%c0_8, %c0_9], %13 {strides = array<i32>} : memref<2x60xf32, #tpu.memory_space<vmem>>, vector<2x60xf32>,
    return
  }
  func.func @transform_0(%arg0: i32) -> (i32, i32) {
    %c0_i32 = arith.constant 0 : i32
    %c0_i32_0 = arith.constant 0 : i32
    return %arg0, %c0_i32 : i32, i32
  }
  func.func @transform_1(%arg0: i32) -> (i32, i32) {
    %c0_i32 = arith.constant 0 : i32
    %c0_i32_0 = arith.constant 0 : i32
    %c0_i32_1 = arith.constant 0 : i32
    return %c0_i32, %c0_i32_0 : i32, i32
  }
  func.func @transform_2(%arg0: i32) -> (i32, i32) {
    %c0_i32 = arith.constant 0 : i32
    %c0_i32_0 = arith.constant 0 : i32
    %c0_i32_1 = arith.constant 0 : i32
    return %c0_i32, %c0_i32_0 : i32, i32
  }
}

</mosaic_0001>

<llo_original>
// kernel: tpu_custom_call.1
$region0: #{tpu_custom_call.1}
  #allocation0 [shape = 'u32[]', space=smem, size = 0x4, offset = 0x4, fixed_abs, tag = 'smem constant byte address 0x4 - core index']
  #allocation1 [shape = 'u32[144,128]{1,0:T(1,128)}', space=vmem, size = 0x12000, scoped, tag = 'internal scratch']
  %s0 = inlined_call_operand.hbm [shape: f32[8,16], index: 0, kind: input, shape index: {}]
  %s1 = inlined_call_operand.hbm [shape: f32[16,60], index: 1, kind: input, shape index: {}]
  %s2 = inlined_call_operand.hbm [shape: f32[2,60], index: 2, kind: output, shape index: {}]
  %s3 = sld [smem:[#allocation0]]
  $region30: #{tpu_custom_call.1} parent=0
    _
  %s5 = ssub.s32 1, %s3
  %s6 = scalar_select 0, %s5, %s3
  $region1: #{tpu_custom_call.1} parent=0
    #allocation2 [shape = 'u8[4096]{0}', space=vmem, size = 0x1000, scoped, tag = 'input window, operand 0, single buffered']
    #allocation3 [shape = 's32[1]{0}', space=sflag, size = 0x4, scoped, tag = 'scoped memory for tpu_custom_call.1']
    #allocation4 [shape = 's32[1]{0}', space=sflag, size = 0x4, scoped, tag = 'scoped memory for tpu_custom_call.1']
    #allocation5 [shape = 'u8[8192]{0}', space=vmem, size = 0x2000, scoped, tag = 'input window, operand 1, single buffered']
    #allocation6 [shape = 's32[1]{0}', space=sflag, size = 0x4, scoped, tag = 'scoped memory for tpu_custom_call.1']
    #allocation7 [shape = 'u8[1024]{0}', space=vmem, size = 0x400, scoped, tag = 'output window, operand 0, single buffered']
    %7 = vsyncpa [#allocation3], 0
    %8 = vsyncpa [#allocation6], 0
    %9 = vsyncpa [#allocation4], 0
    // Predicated region
    $region2: #{tpu_custom_call.1} parent=1 // pred_check
      _
    $region3: #{tpu_custom_call.1} parent=1 // pred_check_branch
      %11 = sbr.rel (0) target = $region5
    $region4: #{tpu_custom_call.1} parent=1 // pred_region
      %s13 = ssub.s32 128, 128
      %14 = vsyncadd [#allocation3], %s13
      %s16 = sshll.u32 [#allocation2], 4
      %s17 = int_to_ptr.vmem [resolvable:$true] %s16
      %19 = dma.hbm_to_vmem [thread:$0]  %s0, 128, %s17, [#allocation3]
    $region5: #{tpu_custom_call.1} parent=1 // pred_fallthru
      _
    // Predicated region
    $region6: #{tpu_custom_call.1} parent=1 // pred_check
      _
    $region7: #{tpu_custom_call.1} parent=1 // pred_check_branch
      %21 = sbr.rel (0) target = $region9
    $region8: #{tpu_custom_call.1} parent=1 // pred_region
      %s23 = ssub.s32 256, 256
      %24 = vsyncadd [#allocation6], %s23
      %s25 = sshll.u32 [#allocation5], 4
      %s26 = int_to_ptr.vmem [resolvable:$true] %s25
      %31 = dma.hbm_to_vmem [thread:$0]  %s1, 256, %s26, [#allocation6], 128, 128, 8
    $region9: #{tpu_custom_call.1} parent=1 // pred_fallthru
      _
    // Predicated region
    $region10: #{tpu_custom_call.1} parent=1 // pred_check
      _
    $region11: #{tpu_custom_call.1} parent=1 // pred_check_branch
      %33 = sbr.rel (0) target = $region13
    $region12: #{tpu_custom_call.1} parent=1 // pred_region
      %34 = dma.done [#allocation3], 128
    $region13: #{tpu_custom_call.1} parent=1 // pred_fallthru
      _
    // Predicated region
    $region14: #{tpu_custom_call.1} parent=1 // pred_check
      _
    $region15: #{tpu_custom_call.1} parent=1 // pred_check_branch
      %36 = sbr.rel (0) target = $region17
    $region16: #{tpu_custom_call.1} parent=1 // pred_region
      %37 = dma.done [#allocation6], 256
    $region17: #{tpu_custom_call.1} parent=1 // pred_fallthru
      _
    %v38 = vld [vmem:[#allocation2] sm:$0xff]
    %v39 = vld [vmem:[#allocation5] sm:$0xff]
    %v40 = vld [vmem:[#allocation5 + $0x8] sm:$0xff]
    %vm41 = vcmask 130048
    %v43 = vsel %vm41, %v38, 0
    %45 = vmatprep.subr.mxu0 0.0
    %46 = vmatpush1.msra.mxu0 0.0
    %47 = vmatprep.subr.mxu0 0.0
    %48 = vmatpush1.msra.mxu0 0.0
    %49 = vmatprep.subr.mxu0 0.0
    %50 = vmatpush1.msra.mxu0 0.0
    %51 = vmatprep.subr.mxu0 0.0
    %52 = vmatpush1.msra.mxu0 0.0
    %53 = vmatprep.subr.mxu0 0.0
    %54 = vmatpush1.msra.mxu0 0.0
    %55 = vmatprep.subr.mxu0 0.0
    %56 = vmatpush1.msra.mxu0 0.0
    %57 = vmatprep.subr.mxu0 0.0
    %58 = vmatpush1.msra.mxu0 0.0
    %59 = vmatprep.subr.mxu0 0.0
    %60 = vmatpush1.msra.mxu0 0.0
    %61 = vmatprep.subr.mxu0 0.0
    %62 = vmatpush1.msra.mxu0 0.0
    %63 = vmatprep.subr.mxu0 0.0
    %64 = vmatpush1.msra.mxu0 0.0
    %65 = vmatprep.subr.mxu0 0.0
    %66 = vmatpush1.msra.mxu0 0.0
    %67 = vmatprep.subr.mxu0 0.0
    %68 = vmatpush1.msra.mxu0 0.0
    %69 = vmatprep.subr.mxu0 0.0
    %70 = vmatpush1.msra.mxu0 0.0
    %71 = vmatprep.subr.mxu0 0.0
    %72 = vmatpush1.msra.mxu0 0.0
    %73 = vmatprep.subr.mxu0 0.0
    %74 = vmatpush1.msra.mxu0 %v40
    %75 = vmatprep.subr.mxu0 0.0
    %76 = vmatpush1.msra.mxu0 %v39
    %77 = vmatprep.subr.mxu0 0.0
    %78 = vmatpush2.msra.mxu0 0.0
    %79 = vmatprep.subr.mxu0 0.0
    %80 = vmatpush2.msra.mxu0 0.0
    %81 = vmatprep.subr.mxu0 0.0
    %82 = vmatpush2.msra.mxu0 0.0
    %83 = vmatprep.subr.mxu0 0.0
    %84 = vmatpush2.msra.mxu0 0.0
    %85 = vmatprep.subr.mxu0 0.0
    %86 = vmatpush2.msra.mxu0 0.0
    %87 = vmatprep.subr.mxu0 0.0
    %88 = vmatpush2.msra.mxu0 0.0
    %89 = vmatprep.subr.mxu0 0.0
    %90 = vmatpush2.msra.mxu0 0.0
    %91 = vmatprep.subr.mxu0 0.0
    %92 = vmatpush2.msra.mxu0 0.0
    %93 = vmatprep.subr.mxu0 0.0
    %94 = vmatpush2.msra.mxu0 0.0
    %95 = vmatprep.subr.mxu0 0.0
    %96 = vmatpush2.msra.mxu0 0.0
    %97 = vmatprep.subr.mxu0 0.0
    %98 = vmatpush2.msra.mxu0 0.0
    %99 = vmatprep.subr.mxu0 0.0
    %100 = vmatpush2.msra.mxu0 0.0
    %101 = vmatprep.subr.mxu0 0.0
    %102 = vmatpush2.msra.mxu0 0.0
    %103 = vmatprep.subr.mxu0 0.0
    %104 = vmatpush2.msra.mxu0 0.0
    %105 = vmatprep.subr.mxu0 0.0
    %106 = vmatpush2.msra.mxu0 0.0
    %107 = vmatprep.subr.mxu0 0.0
    %108 = vmatpush2.msra.mxu0 0.0
    %109 = vmatprep.mubr.f32.mxu0 0.0
    %110 = vmatmul.mubr.f32.gmra.mxu0 %v43
    %v111 = vpop.f32.mrf.mxu0
    %v112 = vadd.f32 0.0, %v111
    %v113 = vpop.f32.mrf.mxu0
    %114 = vdwg.mxu0
    %vm115 = vcmask 490496
    %v116 = vsel %vm115, %v112, 0.0
    %v117 = vrot.slane %v116, 4
    %v118 = vadd.f32 %v116, %v117
    %v119 = vrot.slane %v118, 2
    %v120 = vadd.f32 %v118, %v119
    %v121 = vrot.slane %v120, 1
    %v122 = vadd.f32 %v120, %v121
    %v123 = vmul.f32 %v112, %v112
    %v124 = vsel %vm115, %v123, 0.0
    %v125 = vrot.slane %v124, 4
    %v126 = vadd.f32 %v124, %v125
    %v127 = vrot.slane %v126, 2
    %v128 = vadd.f32 %v126, %v127
    %v129 = vrot.slane %v128, 1
    %v130 = vadd.f32 %v128, %v129
    %vm131 = vcmask 1040384
    %v132 = vsel %vm131, %v122, %v130
    %p133 = scmp.eq.s32.totalorder 0, 0
    // Predicated region
    $region18: #{tpu_custom_call.1} parent=1 // pred_check
      %p134 = pneg %p133
    $region19: #{tpu_custom_call.1} parent=1 // pred_check_branch
      %136 = sbr.rel (%p134) target = $region21
    $region20: #{tpu_custom_call.1} parent=1 // pred_region
      %vm137 = vcmask 484352
      %138 = vst.msk [vmem:[#allocation7] sm:$0x3] %vm137, 0.0
    $region21: #{tpu_custom_call.1} parent=1 // pred_fallthru
      _
    %v139 = vld [vmem:[#allocation7] sm:$0x3]
    %v140 = vadd.f32 %v139, %v132
    %vm141 = vcmask 484352
    %142 = vst.msk [vmem:[#allocation7] sm:$0x3] %vm141, %v140
    // Predicated region
    $region22: #{tpu_custom_call.1} parent=1 // pred_check
      _
    $region23: #{tpu_custom_call.1} parent=1 // pred_check_branch
      %144 = sbr.rel (0) target = $region25
    $region24: #{tpu_custom_call.1} parent=1 // pred_region
      %s146 = ssub.s32 32, 32
      %147 = vsyncadd [#allocation4], %s146
      %s149 = sshll.u32 [#allocation7], 4
      %s150 = int_to_ptr.vmem [resolvable:$true] %s149
      %152 = dma.vmem_to_hbm [thread:$0]  %s150, 32, %s2, [#allocation4]
    $region25: #{tpu_custom_call.1} parent=1 // pred_fallthru
      _
    // Predicated region
    $region26: #{tpu_custom_call.1} parent=1 // pred_check
      _
    $region27: #{tpu_custom_call.1} parent=1 // pred_check_branch
      %154 = sbr.rel (0) target = $region29
    $region28: #{tpu_custom_call.1} parent=1 // pred_region
      %155 = dma.done [#allocation4], 32
    $region29: #{tpu_custom_call.1} parent=1 // pred_fallthru
      _
    %156 = vsyncpa [#allocation3], 1
    %157 = vsyncpa [#allocation6], 1
    %158 = vsyncpa [#allocation4], 1

</llo_original>
